<compile_context>
chip_gen: v7x
topology: tpu7x:2x2x1
jax: 0.10.0
libtpu: 0.0.40
codegen_flags: <defaults>
</compile_context>

<pallas_src>
import functools

import jax
import jax.numpy as jnp
from jax.experimental import pallas as pl
from jax.experimental.pallas import tpu as pltpu


def _round_up(n: int, m: int) -> int:
    return (n + m - 1) // m * m


def _pick_tile(padded: int, preferred: int, quantum: int) -> int:
    """Largest multiple of `quantum` <= preferred that divides `padded`."""
    t = min(preferred, padded)
    t = max(quantum, (t // quantum) * quantum)
    while t > quantum and padded % t != 0:
        t -= quantum
    return t


def _nanwrap_linear_kernel(x_ref, w_ref, b_ref, o_ref, *, compute_dtype):
    x = x_ref[...]                                           # (TM, Dp_in) f32
    nan_elem = jnp.isnan(x)
    has_nan = jnp.any(nan_elem, axis=-1, keepdims=True)      # (TM, 1) bool
    row_mask = jnp.where(has_nan, 0.0, 1.0).astype(jnp.float32)
    # Elementwise zeroing of NaN entries (cheaper than broadcasting the (TM,1)
    # mask over all lanes); the final fx * row_mask reproduces full-row zeroing
    # (including the bias) exactly, so semantics match the PyTorch module.
    masked_x = jnp.where(nan_elem, jnp.zeros_like(x), x)
    fx = jnp.dot(masked_x.astype(compute_dtype), w_ref[...],
                 preferred_element_type=jnp.float32) + b_ref[...]
    o_ref[...] = (fx * row_mask).astype(o_ref.dtype)


def nan_wrapper_linear(x, weight, bias, *, tile_rows=512, tile_n=512,
                       compute_dtype=jnp.float32):
    """NanWrapper(nn.Linear) forward.

    x: (B, S, D_in) float32; weight: (D_out, D_in) (PyTorch layout); bias: (D_out,).
    compute_dtype: jnp.float32 (bit-accurate) or jnp.bfloat16 (MXU-native GEMM).
    """
    B, S, D_in = x.shape
    D_out = weight.shape[0]
    rows = B * S

    # ---- lane/sublane-dense padding --------------------------------------
    D_in_p = _round_up(D_in, 128)
    D_out_p = _round_up(D_out, 128)
    tm = min(tile_rows, _round_up(rows, 8))          # big M tile; small inputs stay small
    rows_p = _round_up(rows, tm)
    tn = _pick_tile(D_out_p, tile_n, 128)            # lane-dense output tile

    x2d = x.reshape(rows, D_in).astype(jnp.float32)
    x2d = jnp.pad(x2d, ((0, rows_p - rows), (0, D_in_p - D_in)))
    w_t = jnp.pad(weight.T.astype(jnp.float32),
                  ((0, D_in_p - D_in), (0, D_out_p - D_out))).astype(compute_dtype)
    b2d = jnp.pad(bias.astype(jnp.float32), (0, D_out_p - D_out)).reshape(1, D_out_p)

    # ---- VMEM budget (Pallas double-buffers every BlockSpec input) --------
    w_itemsize = jnp.dtype(compute_dtype).itemsize
    blk_bytes = (tm * D_in_p * 4) + (D_in_p * tn * w_itemsize) + (tn * 4) + (tm * tn * 4)
    vmem_limit = int(min(max(2 * blk_bytes + (2 << 20), 32 << 20), 96 << 20))

    cost = pl.CostEstimate(
        flops=2 * rows * D_in * D_out,
        transcendentals=0,
        bytes_accessed=(rows * D_in * 4 + D_in * D_out * w_itemsize
                        + D_out * 4 + rows * D_out * 4),
    )

    kernel = functools.partial(_nanwrap_linear_kernel, compute_dtype=compute_dtype)

    out2d = pl.pallas_call(
        kernel,
        out_shape=jax.ShapeDtypeStruct((rows_p, D_out_p), jnp.float32),
        grid_spec=pl.GridSpec(
            grid=(rows_p // tm, D_out_p // tn),
            in_specs=[
                pl.BlockSpec((tm, D_in_p), lambda i, j: (i, 0)),   # x row tile
                pl.BlockSpec((D_in_p, tn), lambda i, j: (0, j)),   # weight N tile
                pl.BlockSpec((1, tn), lambda i, j: (0, j)),        # bias N tile
            ],
            out_specs=pl.BlockSpec((tm, tn), lambda i, j: (i, j)),
        ),
        compiler_params=pltpu.CompilerParams(
            dimension_semantics=("parallel", "parallel"),
            vmem_limit_bytes=vmem_limit,
        ),
        cost_estimate=cost,
    )(x2d, w_t, b2d)

    return out2d[:rows, :D_out].reshape(B, S, D_out).astype(x.dtype)


def _reference(x, weight, bias):
    mask = ~jnp.any(jnp.isnan(x), axis=-1, keepdims=True)
    masked_x = jnp.where(mask, x, jnp.zeros_like(x))
    fx = masked_x @ weight.T + bias
    return fx * mask.astype(fx.dtype)


if __name__ == "__main__":
    key = jax.random.PRNGKey(0)
    B, S, D_in, D_out = 2, 8, 32, 32

    kx, kw, kb = jax.random.split(key, 3)
    x = jax.random.normal(kx, (B, S, D_in), dtype=jnp.float32)
    # Inject NaNs so the masking path is actually exercised.
    x = x.at[0, 3, 5].set(jnp.nan)
    x = x.at[1, 0, 0].set(jnp.nan)

    # Deterministic synthetic Linear parameters (PyTorch nn.Linear shapes).
    weight = jax.random.normal(kw, (D_out, D_in), dtype=jnp.float32) * 0.1
    bias = jax.random.normal(kb, (D_out,), dtype=jnp.float32) * 0.1

    ref = _reference(x, weight, bias)

    # f32 GEMM path: bit-tight against the reference.
    out = jax.block_until_ready(nan_wrapper_linear(x, weight, bias))
    assert out.shape == (B, S, D_out)
    assert not bool(jnp.any(jnp.isnan(out)))
    assert bool(jnp.allclose(out, ref, atol=1e-5, rtol=1e-5))
    # Rows that contained NaN must be fully zero (mask kills bias too).
    assert bool(jnp.all(out[0, 3] == 0.0))
    assert bool(jnp.all(out[1, 0] == 0.0))

    # bf16 MXU path: same semantics, looser numeric tolerance.
    out_bf16 = jax.block_until_ready(
        nan_wrapper_linear(x, weight, bias, compute_dtype=jnp.bfloat16))
    assert out_bf16.shape == (B, S, D_out)
    assert not bool(jnp.any(jnp.isnan(out_bf16)))
    assert bool(jnp.allclose(out_bf16, ref, atol=3e-2, rtol=3e-2))
    assert bool(jnp.all(out_bf16[0, 3] == 0.0))
    assert bool(jnp.all(out_bf16[1, 0] == 0.0))

    print("KERNEL_OK")
</pallas_src>

<mosaic_0001>
module attributes {stable_mosaic.version = 11 : i64} {
  func.func @_nanwrap_linear_kernel(%arg0: i32, %arg1: i32, %arg2: memref<16x128xf32, #tpu.memory_space<vmem>>, %arg3: memref<128x128xf32, #tpu.memory_space<vmem>>, %arg4: memref<1x128xf32, #tpu.memory_space<vmem>>, %arg5: memref<16x128xf32, #tpu.memory_space<vmem>>) attributes {dimension_semantics = [#tpu.dimension_semantics<parallel>, #tpu.dimension_semantics<parallel>], iteration_bounds = array<i64: 1, 1>, scalar_prefetch = 0 : i64, scratch_operands = 0 : i64, tpu.core_type = #tpu.core_type<tc>, window_params = [{transform_indices = @transform_0, window_bounds = array<i64: 16, 128>}, {transform_indices = @transform_1, window_bounds = array<i64: 128, 128>}, {transform_indices = @transform_2, window_bounds = array<i64: 1, 128>}, {transform_indices = @transform_3, window_bounds = array<i64: 16, 128>}]} {
    %c0 = arith.constant 0 : index
    %c0_0 = arith.constant 0 : index
    %0 = vector.load %arg2[%c0, %c0_0] : memref<16x128xf32, #tpu.memory_space<vmem>>, vector<16x128xf32>
    %1 = arith.cmpf one, %0, %0 : vector<16x128xf32>
    %cst = arith.constant 1.000000e+00 : f32
    %cst_1 = arith.constant 0.000000e+00 : f32
    %2 = vector.broadcast %cst : f32 to vector<16x128xf32>
    %3 = vector.broadcast %cst_1 : f32 to vector<16x128xf32>
    %4 = arith.select %1, %2, %3 : vector<16x128xi1>, vector<16x128xf32>
    %cst_2 = arith.constant dense<0xFF800000> : vector<16xf32>
    %5 = vector.multi_reduction <maximumf>, %4, %cst_2 [1] : vector<16x128xf32> to vector<16xf32>
    %cst_3 = arith.constant 0.000000e+00 : f32
    %6 = vector.broadcast %cst_3 : f32 to vector<16xf32>
    %7 = arith.cmpf ogt, %5, %6 : vector<16xf32>
    %8 = vector.shape_cast %7 : vector<16xi1> to vector<16x1xi1>
    %cst_4 = arith.constant 0.000000e+00 : f32
    %cst_5 = arith.constant 1.000000e+00 : f32
    %9 = vector.broadcast %cst_4 : f32 to vector<16x1xf32>
    %10 = vector.broadcast %cst_5 : f32 to vector<16x1xf32>
    %11 = arith.select %8, %9, %10 : vector<16x1xi1>, vector<16x1xf32>
    %cst_6 = arith.constant 0.000000e+00 : f32
    %12 = vector.broadcast %cst_6 : f32 to vector<16x128xf32>
    %13 = arith.select %1, %12, %0 : vector<16x128xi1>, vector<16x128xf32>
    %c0_7 = arith.constant 0 : index
    %c0_8 = arith.constant 0 : index
    %14 = vector.load %arg3[%c0_7, %c0_8] : memref<128x128xf32, #tpu.memory_space<vmem>>, vector<128x128xf32>
    %cst_9 = arith.constant dense<0.000000e+00> : vector<16x128xf32>
    %15 = tpu.matmul %13, %14, %cst_9 {dimension_numbers = #tpu.dot_dimension_numbers<[1], [0], [0], [1], [0, 0, 1, 1], [], []>} : vector<16x128xf32>, vector<128x128xf32>, vector<16x128xf32> -> vector<16x128xf32>
    %c0_10 = arith.constant 0 : index
    %c0_11 = arith.constant 0 : index
    %16 = vector.load %arg4[%c0_10, %c0_11] : memref<1x128xf32, #tpu.memory_space<vmem>>, vector<1x128xf32>
    %17 = vector.broadcast %16 : vector<1x128xf32> to vector<16x128xf32>
    %18 = arith.addf %15, %17 : vector<16x128xf32>
    %19 = vector.broadcast %11 : vector<16x1xf32> to vector<16x128xf32>
    %20 = arith.mulf %18, %19 : vector<16x128xf32>
    %c0_12 = arith.constant 0 : index
    %c0_13 = arith.constant 0 : index
    %21 = vector.load %arg5[%c0_12, %c0_13] : memref<16x128xf32, #tpu.memory_space<vmem>>, vector<16x128xf32>
    tpu.vector_store %arg5[%c0_12, %c0_13], %20 {strides = array<i32>} : memref<16x128xf32, #tpu.memory_space<vmem>>, vector<16x128xf32>,
    return
  }
  func.func @transform_0(%arg0: i32, %arg1: i32) -> (i32, i32) {
    %c0_i32 = arith.constant 0 : i32
    %c0_i32_0 = arith.constant 0 : i32
    return %arg0, %c0_i32 : i32, i32
  }
  func.func @transform_1(%arg0: i32, %arg1: i32) -> (i32, i32) {
    %c0_i32 = arith.constant 0 : i32
    %c0_i32_0 = arith.constant 0 : i32
    return %c0_i32, %arg1 : i32, i32
  }
  func.func @transform_2(%arg0: i32, %arg1: i32) -> (i32, i32) {
    %c0_i32 = arith.constant 0 : i32
    %c0_i32_0 = arith.constant 0 : i32
    return %c0_i32, %arg1 : i32, i32
  }
  func.func @transform_3(%arg0: i32, %arg1: i32) -> (i32, i32) {
    %c0_i32 = arith.constant 0 : i32
    return %arg0, %arg1 : i32, i32
  }
}

</mosaic_0001>

<llo_original>
// kernel: tpu_custom_call.1
$region0: #{tpu_custom_call.1}
  #allocation0 [shape = 'u32[]', space=smem, size = 0x4, offset = 0x4, fixed_abs, tag = 'smem constant byte address 0x4 - core index']
  #allocation1 [shape = 'u32[144,128]{1,0:T(1,128)}', space=vmem, size = 0x12000, scoped, tag = 'internal scratch']
  %s0 = inlined_call_operand.hbm [shape: f32[16,128], index: 0, kind: input, shape index: {}]
  %s1 = inlined_call_operand.hbm [shape: f32[128,128], index: 1, kind: input, shape index: {}]
  %s2 = inlined_call_operand.vmem [shape: f32[1,128], index: 2, kind: input, shape index: {}]
  %s3 = inlined_call_operand.hbm [shape: f32[16,128], index: 3, kind: output, shape index: {}]
  %s4 = sld [smem:[#allocation0]]
  $region30: #{tpu_custom_call.1} parent=0
    _
  %s6 = ssub.s32 1, %s4
  %s7 = scalar_select 0, %s6, %s4
  $region1: #{tpu_custom_call.1} parent=0
    #allocation2 [shape = 'u8[8192]{0}', space=vmem, size = 0x2000, scoped, tag = 'input window, operand 0, single buffered']
    #allocation3 [shape = 's32[1]{0}', space=sflag, size = 0x4, scoped, tag = 'scoped memory for tpu_custom_call.1']
    #allocation4 [shape = 's32[1]{0}', space=sflag, size = 0x4, scoped, tag = 'scoped memory for tpu_custom_call.1']
    #allocation5 [shape = 'u8[65536]{0}', space=vmem, size = 0x10000, scoped, tag = 'input window, operand 1, single buffered']
    #allocation6 [shape = 's32[1]{0}', space=sflag, size = 0x4, scoped, tag = 'scoped memory for tpu_custom_call.1']
    #allocation7 [shape = 'u8[8192]{0}', space=vmem, size = 0x2000, scoped, tag = 'output window, operand 0, single buffered']
    %8 = vsyncpa [#allocation3], 0
    %9 = vsyncpa [#allocation6], 0
    %10 = vsyncpa [#allocation4], 0
    // Predicated region
    $region2: #{tpu_custom_call.1} parent=1 // pred_check
      _
    $region3: #{tpu_custom_call.1} parent=1 // pred_check_branch
      %12 = sbr.rel (0) target = $region5
    $region4: #{tpu_custom_call.1} parent=1 // pred_region
      %s14 = ssub.s32 256, 256
      %15 = vsyncadd [#allocation3], %s14
      %s16 = sshll.u32 [#allocation2], 4
      %s17 = int_to_ptr.vmem [resolvable:$true] %s16
      %22 = dma.hbm_to_vmem [thread:$0]  %s0, 256, %s17, [#allocation3], 128, 128, 8
    $region5: #{tpu_custom_call.1} parent=1 // pred_fallthru
      _
    // Predicated region
    $region6: #{tpu_custom_call.1} parent=1 // pred_check
      _
    $region7: #{tpu_custom_call.1} parent=1 // pred_check_branch
      %24 = sbr.rel (0) target = $region9
    $region8: #{tpu_custom_call.1} parent=1 // pred_region
      %s26 = ssub.s32 2048, 2048
      %27 = vsyncadd [#allocation6], %s26
      %s28 = sshll.u32 [#allocation5], 4
      %s29 = int_to_ptr.vmem [resolvable:$true] %s28
      %34 = dma.hbm_to_vmem [thread:$0]  %s1, 2048, %s29, [#allocation6], 128, 128, 8
    $region9: #{tpu_custom_call.1} parent=1 // pred_fallthru
      _
    // Predicated region
    $region10: #{tpu_custom_call.1} parent=1 // pred_check
      _
    $region11: #{tpu_custom_call.1} parent=1 // pred_check_branch
      %36 = sbr.rel (0) target = $region13
    $region12: #{tpu_custom_call.1} parent=1 // pred_region
      _
    $region13: #{tpu_custom_call.1} parent=1 // pred_fallthru
      _
    // Predicated region
    $region14: #{tpu_custom_call.1} parent=1 // pred_check
      _
    $region15: #{tpu_custom_call.1} parent=1 // pred_check_branch
      %38 = sbr.rel (0) target = $region17
    $region16: #{tpu_custom_call.1} parent=1 // pred_region
      %39 = dma.done [#allocation3], 256
    $region17: #{tpu_custom_call.1} parent=1 // pred_fallthru
      _
    // Predicated region
    $region18: #{tpu_custom_call.1} parent=1 // pred_check
      _
    $region19: #{tpu_custom_call.1} parent=1 // pred_check_branch
      %41 = sbr.rel (0) target = $region21
    $region20: #{tpu_custom_call.1} parent=1 // pred_region
      %42 = dma.done [#allocation6], 2048
    $region21: #{tpu_custom_call.1} parent=1 // pred_fallthru
      _
    %v43 = vld [vmem:[#allocation2] sm:$0xff]
    %v44 = vld [vmem:[#allocation2 + $0x8] sm:$0xff]
    %vm45 = vcmp.ne.f32.partialorder %v43, %v43
    %vm46 = vcmp.ne.f32.partialorder %v44, %v44
    %v47 = vsel %vm45, 1.0, 0.0
    %v48 = vsel %vm46, 1.0, 0.0
    %49 = vmax.xlane.f32.xlu0 %v47
    %v50 = vpop.xlane.xlu0 %49
    %51 = vmax.xlane.f32.xlu0 %v48
    %v52 = vpop.xlane.xlu0 %51
    %vm53 = vcmp.gt.f32.partialorder %v50, 0.0
    %vm54 = vcmp.gt.f32.partialorder %v52, 0.0
    %v55 = vsel %vm53, 0.0, 1.0
    %v56 = vsel %vm54, 0.0, 1.0
    %v57 = vsel %vm45, 0.0, %v43
    %v58 = vsel %vm46, 0.0, %v44
    %v59 = vld [vmem:[#allocation5] sm:$0xff]
    %v60 = vld [vmem:[#allocation5 + $0x8] sm:$0xff]
    %v61 = vld [vmem:[#allocation5 + $0x10] sm:$0xff]
    %v62 = vld [vmem:[#allocation5 + $0x18] sm:$0xff]
    %v63 = vld [vmem:[#allocation5 + $0x20] sm:$0xff]
    %v64 = vld [vmem:[#allocation5 + $0x28] sm:$0xff]
    %v65 = vld [vmem:[#allocation5 + $0x30] sm:$0xff]
    %v66 = vld [vmem:[#allocation5 + $0x38] sm:$0xff]
    %v67 = vld [vmem:[#allocation5 + $0x40] sm:$0xff]
    %v68 = vld [vmem:[#allocation5 + $0x48] sm:$0xff]
    %v69 = vld [vmem:[#allocation5 + $0x50] sm:$0xff]
    %v70 = vld [vmem:[#allocation5 + $0x58] sm:$0xff]
    %v71 = vld [vmem:[#allocation5 + $0x60] sm:$0xff]
    %v72 = vld [vmem:[#allocation5 + $0x68] sm:$0xff]
    %v73 = vld [vmem:[#allocation5 + $0x70] sm:$0xff]
    %v74 = vld [vmem:[#allocation5 + $0x78] sm:$0xff]
    %v75 = vld [vmem:[%s2] sm:$0x1]
    %v77 = vlaneseq
    %v78 = vshrl.u32 %v77, 7
    %v79 = vsub.s32 0, %v78
    %v80 = vrot.slane %v75, %v79
    %82 = vmatprep.subr.mxu0 0.0
    %83 = vmatpush1.msra.mxu0 %v59
    %84 = vmatprep.subr.mxu0 0.0
    %85 = vmatpush1.msra.mxu0 %v60
    %86 = vmatprep.subr.mxu0 0.0
    %87 = vmatpush1.msra.mxu0 %v61
    %88 = vmatprep.subr.mxu0 0.0
    %89 = vmatpush1.msra.mxu0 %v62
    %90 = vmatprep.subr.mxu0 0.0
    %91 = vmatpush1.msra.mxu0 %v63
    %92 = vmatprep.subr.mxu0 0.0
    %93 = vmatpush1.msra.mxu0 %v64
    %94 = vmatprep.subr.mxu0 0.0
    %95 = vmatpush1.msra.mxu0 %v65
    %96 = vmatprep.subr.mxu0 0.0
    %97 = vmatpush1.msra.mxu0 %v66
    %98 = vmatprep.subr.mxu0 0.0
    %99 = vmatpush1.msra.mxu0 %v67
    %100 = vmatprep.subr.mxu0 0.0
    %101 = vmatpush1.msra.mxu0 %v68
    %102 = vmatprep.subr.mxu0 0.0
    %103 = vmatpush1.msra.mxu0 %v69
    %104 = vmatprep.subr.mxu0 0.0
    %105 = vmatpush1.msra.mxu0 %v70
    %106 = vmatprep.subr.mxu0 0.0
    %107 = vmatpush1.msra.mxu0 %v71
    %108 = vmatprep.subr.mxu0 0.0
    %109 = vmatpush1.msra.mxu0 %v72
    %110 = vmatprep.subr.mxu0 0.0
    %111 = vmatpush1.msra.mxu0 %v73
    %112 = vmatprep.subr.mxu0 0.0
    %113 = vmatpush1.msra.mxu0 %v74
    %114 = vmatprep.subr.mxu0 0.0
    %115 = vmatpush1.msra.mxu0 0.0
    %116 = vmatprep.subr.mxu0 0.0
    %117 = vmatpush1.msra.mxu0 0.0
    %118 = vmatprep.subr.mxu0 0.0
    %119 = vmatpush1.msra.mxu0 0.0
    %120 = vmatprep.subr.mxu0 0.0
    %121 = vmatpush1.msra.mxu0 0.0
    %122 = vmatprep.subr.mxu0 0.0
    %123 = vmatpush1.msra.mxu0 0.0
    %124 = vmatprep.subr.mxu0 0.0
    %125 = vmatpush1.msra.mxu0 0.0
    %126 = vmatprep.subr.mxu0 0.0
    %127 = vmatpush1.msra.mxu0 0.0
    %128 = vmatprep.subr.mxu0 0.0
    %129 = vmatpush1.msra.mxu0 0.0
    %130 = vmatprep.subr.mxu0 0.0
    %131 = vmatpush1.msra.mxu0 0.0
    %132 = vmatprep.subr.mxu0 0.0
    %133 = vmatpush1.msra.mxu0 0.0
    %134 = vmatprep.subr.mxu0 0.0
    %135 = vmatpush1.msra.mxu0 0.0
    %136 = vmatprep.subr.mxu0 0.0
    %137 = vmatpush1.msra.mxu0 0.0
    %138 = vmatprep.subr.mxu0 0.0
    %139 = vmatpush1.msra.mxu0 0.0
    %140 = vmatprep.subr.mxu0 0.0
    %141 = vmatpush1.msra.mxu0 0.0
    %142 = vmatprep.subr.mxu0 0.0
    %143 = vmatpush1.msra.mxu0 0.0
    %144 = vmatprep.subr.mxu0 0.0
    %145 = vmatpush1.msra.mxu0 0.0
    %146 = vmatprep.mubr.f32.mxu0 0.0
    %147 = vmatmul.mubr.f32.gmra.mrb[0].mxu0 %v57
    %v148 = vpop.f32.mrb[0].mxu0
    %v149 = vadd.f32 %v80, %v148
    %v150 = vpop.f32.mrb[0].mxu0
    %151 = vmatprep.mubr.f32.mxu0 0.0
    %152 = vmatmul.mubr.f32.gmra.mrb[0].mxu0 %v58
    %v153 = vpop.f32.mrb[0].mxu0
    %v154 = vadd.f32 %v80, %v153
    %v155 = vpop.f32.mrb[0].mxu0
    %156 = vdwg.mxu0
    %v157 = vmul.f32 %v149, %v55
    %v158 = vmul.f32 %v154, %v56
    %159 = vst [vmem:[#allocation7] sm:$0xff] %v157
    %160 = vst [vmem:[#allocation7 + $0x8] sm:$0xff] %v158
    // Predicated region
    $region22: #{tpu_custom_call.1} parent=1 // pred_check
      _
    $region23: #{tpu_custom_call.1} parent=1 // pred_check_branch
      %162 = sbr.rel (0) target = $region25
    $region24: #{tpu_custom_call.1} parent=1 // pred_region
      %s164 = ssub.s32 256, 256
      %165 = vsyncadd [#allocation4], %s164
      %s166 = sshll.u32 [#allocation7], 4
      %s167 = int_to_ptr.vmem [resolvable:$true] %s166
      %172 = dma.vmem_to_hbm [thread:$0]  %s167, 256, %s3, [#allocation4], 128, 128, 8
    $region25: #{tpu_custom_call.1} parent=1 // pred_fallthru
      _
    // Predicated region
    $region26: #{tpu_custom_call.1} parent=1 // pred_check
      _
    $region27: #{tpu_custom_call.1} parent=1 // pred_check_branch
      %174 = sbr.rel (0) target = $region29
    $region28: #{tpu_custom_call.1} parent=1 // pred_region
      %175 = dma.done [#allocation4], 256
    $region29: #{tpu_custom_call.1} parent=1 // pred_fallthru
      _
    %176 = vsyncpa [#allocation3], 1
    %177 = vsyncpa [#allocation6], 1
    %178 = vsyncpa [#allocation4], 1

</llo_original>
